<compile_context>
chip_gen: v6e
topology: v6e:2x2x1
jax: 0.10.0
libtpu: 0.0.40
codegen_flags: <defaults>
</compile_context>

<pallas_src>
import jax
import jax.numpy as jnp
from jax import lax
from jax.experimental import pallas as pl
from jax.experimental.pallas import tpu as pltpu


def _patch_embed_kernel(x_ref, w_ref, cls_ref, pos_ref, o_ref):
    # x_ref:   (1, C, N)   one batch element, channel-major (no HBM transpose)
    # w_ref:   (C, E)      1x1 conv weight, (in, out)
    # cls_ref: (1, 1, E)   this batch element's cls token (f32)
    # pos_ref: (N+1, E)    position embedding with the conv bias folded into rows :N
    # o_ref:   (1, N+1, E)
    # Transposed-LHS matmul on the MXU: contract dim 0 of both operands.
    proj = lax.dot_general(
        x_ref[0], w_ref[...],
        dimension_numbers=(((0,), (0,)), ((), ())),
        preferred_element_type=jnp.float32)                          # (N, E)
    cls_row = cls_ref[0].astype(jnp.float32)                         # (1, E)
    full = jnp.concatenate([proj, cls_row], axis=0) + pos_ref[...]   # (N+1, E)
    o_ref[0] = full.astype(o_ref.dtype)                              # one full-tile store


def patch_embedding(x_nchw, weight, bias, cls_token, pos_token,
                    compute_dtype=jnp.float32):
    """x_nchw: (B, C, H, W).  Returns (B, H*W + 1, E) in x_nchw.dtype.

    compute_dtype: dtype of the x / weight streams fed to the MXU (f32 or bf16);
    accumulation is always f32.
    """
    B, C, H, W = x_nchw.shape
    E = weight.shape[0]
    N = H * W

    # (B,C,H,W) -> (B,C,N): pure reshape, no HBM transpose (transpose fused into matmul).
    x_cn = x_nchw.reshape(B, C, N).astype(compute_dtype)
    w_ce = jnp.transpose(weight.reshape(E, C), (1, 0)).astype(compute_dtype)   # (C, E)
    # Fold the conv bias into the patch-token rows of the positional embedding.
    pos_adj = pos_token.astype(jnp.float32).at[:N].add(bias.astype(jnp.float32))
    cls_f32 = cls_token.astype(jnp.float32)

    # TODO(synk): for B == 1 on v7x, split N into >= 2 parallel token tiles so the
    # second TensorCore isn't idle; for large B on v5e/v6e, fold B into the matmul
    # M dimension to amortize per-grid-step overhead and fill the MXU better.
    return pl.pallas_call(
        _patch_embed_kernel,
        out_shape=jax.ShapeDtypeStruct((B, N + 1, E), x_nchw.dtype),
        grid_spec=pltpu.PrefetchScalarGridSpec(
            num_scalar_prefetch=0,
            grid=(B,),                                             # one batch element / step
            in_specs=[
                pl.BlockSpec((1, C, N), lambda b: (b, 0, 0)),      # x, channel-major
                pl.BlockSpec((C, E), lambda b: (0, 0)),            # weight (resident)
                pl.BlockSpec((1, 1, E), lambda b: (b, 0, 0)),      # cls token
                pl.BlockSpec((N + 1, E), lambda b: (0, 0)),        # pos (+bias, resident)
            ],
            out_specs=pl.BlockSpec((1, N + 1, E), lambda b: (b, 0, 0)),
        ),
        compiler_params=pltpu.CompilerParams(
            dimension_semantics=("parallel",)),                    # shard batch over TCs
    )(x_cn, w_ce, cls_f32, pos_adj)


def reference(x_nchw, weight, bias, cls_token, pos_token, compute_dtype=jnp.float32):
    B, C, H, W = x_nchw.shape
    E = weight.shape[0]
    x_tok = jnp.transpose(x_nchw.reshape(B, C, H * W), (0, 2, 1)).astype(compute_dtype)
    w = weight.reshape(E, C).astype(compute_dtype)
    proj = jnp.einsum("bnc,ec->bne", x_tok, w,
                      preferred_element_type=jnp.float32) + bias
    out = jnp.concatenate([proj, cls_token.astype(jnp.float32)], axis=1)
    return (out + pos_token[None, :, :]).astype(x_nchw.dtype)


if __name__ == "__main__":
    # Small shapes consistent with the module (original: B=2, C=1024, 14x14, E=256)
    B, C, H, W, E = 2, 64, 8, 8, 128
    N = H * W

    key = jax.random.PRNGKey(0)
    k_x, k_w, k_b, k_cls, k_pos = jax.random.split(key, 5)

    x = jax.random.normal(k_x, (B, C, H, W), dtype=jnp.float32)
    conv_weight = jax.random.normal(k_w, (E, C, 1, 1), dtype=jnp.float32) * 0.02
    conv_bias = jax.random.normal(k_b, (E,), dtype=jnp.float32) * 0.02
    cls_token = jax.random.normal(k_cls, (B, 1, E), dtype=jnp.float32)
    pos_token = jax.random.normal(k_pos, (N + 1, E), dtype=jnp.float32)

    # f32 compute path (strict check)
    out = patch_embedding(x, conv_weight, conv_bias, cls_token, pos_token)
    out = jax.block_until_ready(out)
    ref = reference(x, conv_weight, conv_bias, cls_token, pos_token)
    assert out.shape == (B, N + 1, E), out.shape
    assert jnp.allclose(out, ref, atol=1e-4, rtol=1e-4), "f32 mismatch vs reference"

    # bf16 compute path (halves the x / weight HBM streams; f32 accumulation)
    out_bf16 = patch_embedding(x, conv_weight, conv_bias, cls_token, pos_token,
                               compute_dtype=jnp.bfloat16)
    out_bf16 = jax.block_until_ready(out_bf16)
    ref_bf16 = reference(x, conv_weight, conv_bias, cls_token, pos_token,
                         compute_dtype=jnp.bfloat16)
    assert jnp.allclose(out_bf16, ref_bf16, atol=2e-2, rtol=2e-2), "bf16 mismatch"

    print("KERNEL_OK")
</pallas_src>

<mosaic_0001>
module attributes {stable_mosaic.version = 11 : i64} {
  func.func @_patch_embed_kernel(%arg0: i32, %arg1: memref<1x64x64xf32, #tpu.memory_space<vmem>>, %arg2: memref<64x128xf32, #tpu.memory_space<vmem>>, %arg3: memref<1x1x128xf32, #tpu.memory_space<vmem>>, %arg4: memref<65x128xf32, #tpu.memory_space<vmem>>, %arg5: memref<1x65x128xf32, #tpu.memory_space<vmem>>) attributes {dimension_semantics = [#tpu.dimension_semantics<parallel>], iteration_bounds = array<i64: 2>, scalar_prefetch = 0 : i64, scratch_operands = 0 : i64, tpu.core_type = #tpu.core_type<tc>, window_params = [{transform_indices = @transform_0, window_bounds = array<i64: 1, 64, 64>}, {pipeline_mode = #tpu.pipeline_mode<synchronous>, transform_indices = @transform_1, window_bounds = array<i64: 64, 128>}, {transform_indices = @transform_2, window_bounds = array<i64: 1, 1, 128>}, {pipeline_mode = #tpu.pipeline_mode<synchronous>, transform_indices = @transform_3, window_bounds = array<i64: 65, 128>}, {transform_indices = @transform_4, window_bounds = array<i64: 1, 65, 128>}]} {
    %c0 = arith.constant 0 : index
    %c0_0 = arith.constant 0 : index
    %c0_1 = arith.constant 0 : index
    %0 = vector.load %arg1[%c0, %c0_0, %c0_1] : memref<1x64x64xf32, #tpu.memory_space<vmem>>, vector<1x64x64xf32>
    %1 = vector.shape_cast %0 : vector<1x64x64xf32> to vector<64x64xf32>
    %c0_2 = arith.constant 0 : index
    %c0_3 = arith.constant 0 : index
    %2 = vector.load %arg2[%c0_2, %c0_3] : memref<64x128xf32, #tpu.memory_space<vmem>>, vector<64x128xf32>
    %cst = arith.constant dense<0.000000e+00> : vector<64x128xf32>
    %3 = tpu.matmul %1, %2, %cst {dimension_numbers = #tpu.dot_dimension_numbers<[0], [0], [1], [1], [0, 1, 1, 1], [], []>} : vector<64x64xf32>, vector<64x128xf32>, vector<64x128xf32> -> vector<64x128xf32>
    %c0_4 = arith.constant 0 : index
    %c0_5 = arith.constant 0 : index
    %c0_6 = arith.constant 0 : index
    %4 = vector.load %arg3[%c0_4, %c0_5, %c0_6] : memref<1x1x128xf32, #tpu.memory_space<vmem>>, vector<1x1x128xf32>
    %5 = vector.shape_cast %4 : vector<1x1x128xf32> to vector<1x128xf32>
    %6 = tpu.concatenate %3, %5 in 0 : vector<64x128xf32>, vector<1x128xf32> -> vector<65x128xf32>
    %c0_7 = arith.constant 0 : index
    %c0_8 = arith.constant 0 : index
    %7 = vector.load %arg4[%c0_7, %c0_8] : memref<65x128xf32, #tpu.memory_space<vmem>>, vector<65x128xf32>
    %8 = arith.addf %6, %7 : vector<65x128xf32>
    %c0_9 = arith.constant 0 : index
    %c0_10 = arith.constant 0 : index
    %c0_11 = arith.constant 0 : index
    %9 = vector.load %arg5[%c0_9, %c0_10, %c0_11] : memref<1x65x128xf32, #tpu.memory_space<vmem>>, vector<1x65x128xf32>
    %10 = vector.shape_cast %9 : vector<1x65x128xf32> to vector<65x128xf32>
    %11 = vector.shape_cast %8 : vector<65x128xf32> to vector<1x65x128xf32>
    tpu.vector_store %arg5[%c0_9, %c0_10, %c0_11], %11 {strides = array<i32>} : memref<1x65x128xf32, #tpu.memory_space<vmem>>, vector<1x65x128xf32>,
    return
  }
  func.func @transform_0(%arg0: i32) -> (i32, i32, i32) {
    %c0_i32 = arith.constant 0 : i32
    %c0_i32_0 = arith.constant 0 : i32
    %c0_i32_1 = arith.constant 0 : i32
    return %arg0, %c0_i32, %c0_i32_0 : i32, i32, i32
  }
  func.func @transform_1(%arg0: i32) -> (i32, i32) {
    %c0_i32 = arith.constant 0 : i32
    %c0_i32_0 = arith.constant 0 : i32
    %c0_i32_1 = arith.constant 0 : i32
    return %c0_i32, %c0_i32_0 : i32, i32
  }
  func.func @transform_2(%arg0: i32) -> (i32, i32, i32) {
    %c0_i32 = arith.constant 0 : i32
    %c0_i32_0 = arith.constant 0 : i32
    %c0_i32_1 = arith.constant 0 : i32
    return %arg0, %c0_i32, %c0_i32_0 : i32, i32, i32
  }
  func.func @transform_3(%arg0: i32) -> (i32, i32) {
    %c0_i32 = arith.constant 0 : i32
    %c0_i32_0 = arith.constant 0 : i32
    %c0_i32_1 = arith.constant 0 : i32
    return %c0_i32, %c0_i32_0 : i32, i32
  }
  func.func @transform_4(%arg0: i32) -> (i32, i32, i32) {
    %c0_i32 = arith.constant 0 : i32
    %c0_i32_0 = arith.constant 0 : i32
    %c0_i32_1 = arith.constant 0 : i32
    return %arg0, %c0_i32, %c0_i32_0 : i32, i32, i32
  }
}

</mosaic_0001>

<llo_original>
// kernel: tpu_custom_call.1
$region0: #{tpu_custom_call.1}
  #allocation0 [shape = 'u32[]', space=smem, size = 0x4, offset = 0x4, fixed_abs, tag = 'smem constant byte address 0x4 - core index']
  #allocation1 [shape = 'u32[144,128]{1,0:T(1,128)}', space=vmem, size = 0x12000, scoped, tag = 'internal scratch']
  %s0 = inlined_call_operand.hbm [shape: f32[2,64,64], index: 0, kind: input, shape index: {}]
  %s1 = inlined_call_operand.hbm [shape: f32[64,128], index: 1, kind: input, shape index: {}]
  %s2 = inlined_call_operand.vmem [shape: f32[2,1,128], index: 2, kind: input, shape index: {}]
  %s3 = inlined_call_operand.hbm [shape: f32[65,128], index: 3, kind: input, shape index: {}]
  %s4 = inlined_call_operand.vmem [shape: f32[2,65,128], index: 4, kind: output, shape index: {}]
  %s5 = sld [smem:[#allocation0]]
  $region61: #{tpu_custom_call.1} parent=0
    _
  %s7 = ssub.s32 1, %s5
  %s8 = scalar_select 0, %s7, %s5
  $region1: #{tpu_custom_call.1} parent=0
    #allocation2 [shape = 'u8[65536]{0}', space=vmem, size = 0x10000, scoped, tag = 'input window, operand 0']
    #allocation3 [shape = 's32[2]{0}', space=sflag, size = 0x8, scoped, tag = 'scoped memory for tpu_custom_call.1']
    #allocation4 [shape = 'u8[32768]{0}', space=vmem, size = 0x8000, scoped, tag = 'input window, operand 1, single buffered']
    #allocation5 [shape = 's32[1]{0}', space=sflag, size = 0x4, scoped, tag = 'scoped memory for tpu_custom_call.1']
    #allocation6 [shape = 'u8[36864]{0}', space=vmem, size = 0x9000, scoped, tag = 'input window, operand 3, single buffered']
    %9 = vsyncpa [#allocation3], 0
    %s10 = scalar_lea.sflag [#allocation3], 1
    %11 = vsyncpa %s10, 0
    %12 = vsyncpa [#allocation5], 0
    loop: start=0, step=1, limit=4
    $region2: #{tpu_custom_call.1} parent=1 // loop_pre_header
      _
    $region3: #{tpu_custom_call.1} parent=1 // loop_header
      %s14 = sphi 0, %s18
      %p15 = scmp.ge.s32.totalorder %s14, 4
      %s24 = sphi 0, %s26
      %s27 = sphi 0, %s24
      %s28 = sphi 0, %s27
      %s44 = sphi 0, %s28
      %s48 = sphi 0, %s48
      %s50 = sphi 0, %s48
      %s51 = sphi 0, %s50
      %s65 = sphi 0, %s51
      %s71 = sphi 0, %s73
      %s74 = sphi 0, %s71
      %s75 = sphi 0, %s74
      %s91 = sphi 0, %s75
      %s95 = sphi 0, %s95
      %s97 = sphi 0, %s95
      %s98 = sphi 0, %s97
      %s112 = sphi 0, %s98
      %s118 = sphi 0, %s120
      %s121 = sphi 0, %s118
      %s122 = sphi 0, %s121
      %s138 = sphi 0, %s122
    $region4: #{tpu_custom_call.1} parent=1 // loop_header_branch
      %17 = sbr.rel (%p15) target = $region8
    $region5: #{tpu_custom_call.1} parent=1 // loop_body
      %s19 = ssub.s32 %s14, 1
      %s20 = ssub.s32 %s14, 2
      %s21 = sadd.s32 %s14, 1
      %s22 = ssub.s32 %s14, %s21
      %p23 = scmp.eq.s32.totalorder %s22, 0
      %s25 = sadd.s32 %s24, 1
      %s26 = scalar_select %p23, %s24, %s25
      %p29 = pneg %p23
      %p30 = scmp.eq.s32.totalorder %s14, 1
      %p31 = por %p29, %p30
      %p32 = scmp.ne.s32.totalorder %s24, %s27
      %p33 = scmp.eq.s32.totalorder %s14, 0
      %p34 = por %p32, %p33
      %p35 = scmp.ne.s32.totalorder %s24, %s27
      %p36 = scmp.eq.s32.totalorder %s19, 1
      %p37 = por %p35, %p36
      %p38 = scmp.ne.s32.totalorder %s27, %s28
      %p39 = scmp.eq.s32.totalorder %s19, 0
      %p40 = por %p38, %p39
      %p41 = scmp.ne.s32.totalorder %s27, %s28
      %p42 = scmp.eq.s32.totalorder %s20, 1
      %p43 = por %p41, %p42
      %p45 = scmp.ne.s32.totalorder %s28, %s44
      %p46 = scmp.eq.s32.totalorder %s20, 0
      %p47 = por %p45, %p46
      %s49 = sadd.s32 %s48, 1
      %p52 = scmp.eq.s32.totalorder %s14, 1
      %p53 = scmp.ne.s32.totalorder %s48, %s50
      %p54 = scmp.eq.s32.totalorder %s14, 0
      %p55 = por %p53, %p54
      %p56 = scmp.ne.s32.totalorder %s48, %s50
      %p57 = scmp.eq.s32.totalorder %s19, 1
      %p58 = por %p56, %p57
      %p59 = scmp.ne.s32.totalorder %s50, %s51
      %p60 = scmp.eq.s32.totalorder %s19, 0
      %p61 = por %p59, %p60
      %p62 = scmp.ne.s32.totalorder %s50, %s51
      %p63 = scmp.eq.s32.totalorder %s20, 1
      %p64 = por %p62, %p63
      %p66 = scmp.ne.s32.totalorder %s51, %s65
      %p67 = scmp.eq.s32.totalorder %s20, 0
      %p68 = por %p66, %p67
      %s69 = ssub.s32 %s14, %s21
      %p70 = scmp.eq.s32.totalorder %s69, 0
      %s72 = sadd.s32 %s71, 1
      %s73 = scalar_select %p70, %s71, %s72
      %p76 = pneg %p70
      %p77 = scmp.eq.s32.totalorder %s14, 1
      %p78 = por %p76, %p77
      %p79 = scmp.ne.s32.totalorder %s71, %s74
      %p80 = scmp.eq.s32.totalorder %s14, 0
      %p81 = por %p79, %p80
      %p82 = scmp.ne.s32.totalorder %s71, %s74
      %p83 = scmp.eq.s32.totalorder %s19, 1
      %p84 = por %p82, %p83
      %p85 = scmp.ne.s32.totalorder %s74, %s75
      %p86 = scmp.eq.s32.totalorder %s19, 0
      %p87 = por %p85, %p86
      %p88 = scmp.ne.s32.totalorder %s74, %s75
      %p89 = scmp.eq.s32.totalorder %s20, 1
      %p90 = por %p88, %p89
      %p92 = scmp.ne.s32.totalorder %s75, %s91
      %p93 = scmp.eq.s32.totalorder %s20, 0
      %p94 = por %p92, %p93
      %s96 = sadd.s32 %s95, 1
      %p99 = scmp.eq.s32.totalorder %s14, 1
      %p100 = scmp.ne.s32.totalorder %s95, %s97
      %p101 = scmp.eq.s32.totalorder %s14, 0
      %p102 = por %p100, %p101
      %p103 = scmp.ne.s32.totalorder %s95, %s97
      %p104 = scmp.eq.s32.totalorder %s19, 1
      %p105 = por %p103, %p104
      %p106 = scmp.ne.s32.totalorder %s97, %s98
      %p107 = scmp.eq.s32.totalorder %s19, 0
      %p108 = por %p106, %p107
      %p109 = scmp.ne.s32.totalorder %s97, %s98
      %p110 = scmp.eq.s32.totalorder %s20, 1
      %p111 = por %p109, %p110
      %p113 = scmp.ne.s32.totalorder %s98, %s112
      %p114 = scmp.eq.s32.totalorder %s20, 0
      %p115 = por %p113, %p114
      %s116 = ssub.s32 %s14, %s21
      %p117 = scmp.eq.s32.totalorder %s116, 0
      %s119 = sadd.s32 %s118, 1
      %s120 = scalar_select %p117, %s118, %s119
      %p123 = pneg %p117
      %p124 = scmp.eq.s32.totalorder %s14, 1
      %p125 = por %p123, %p124
      %p126 = scmp.ne.s32.totalorder %s118, %s121
      %p127 = scmp.eq.s32.totalorder %s14, 0
      %p128 = por %p126, %p127
      %p129 = scmp.ne.s32.totalorder %s118, %s121
      %p130 = scmp.eq.s32.totalorder %s19, 1
      %p131 = por %p129, %p130
      %p132 = scmp.ne.s32.totalorder %s121, %s122
      %p133 = scmp.eq.s32.totalorder %s19, 0
      %p134 = por %p132, %p133
      %p135 = scmp.ne.s32.totalorder %s121, %s122
      %p136 = scmp.eq.s32.totalorder %s20, 1
      %p137 = por %p135, %p136
      %p139 = scmp.ne.s32.totalorder %s122, %s138
      %p140 = scmp.eq.s32.totalorder %s20, 0
      %p141 = por %p139, %p140
      %p142 = scmp.le.s32.totalorder 1, %s14
      %p143 = scmp.lt.s32.totalorder %s14, 3
      %p144 = pnand %p142, %p143
      %p145 = pneg %p144
      // Predicated region
      $region9: #{tpu_custom_call.1} parent=5 // pred_check
        _
      $region10: #{tpu_custom_call.1} parent=5 // pred_check_branch
        %147 = sbr.rel (%p144) target = $region12
      $region11: #{tpu_custom_call.1} parent=5 // pred_region
        %s148 = ssub.s32 %s14, 1
        // Predicated region
        $region13: #{tpu_custom_call.1} parent=11 // pred_check
          %p149 = pneg %p61
        $region14: #{tpu_custom_call.1} parent=11 // pred_check_branch
          %151 = sbr.rel (%p149) target = $region16
        $region15: #{tpu_custom_call.1} parent=11 // pred_region
          %s153 = ssub.s32 1024, 1024
          %154 = vsyncadd [#allocation5], %s153
          %s155 = sshll.u32 [#allocation4], 4
          %s156 = int_to_ptr.vmem [resolvable:$true] %s155
          %161 = dma.hbm_to_vmem [thread:$0]  %s1, 1024, %s156, [#allocation5], 128, 128, 8
        $region16: #{tpu_custom_call.1} parent=11 // pred_fallthru
          _
        // Predicated region
        $region17: #{tpu_custom_call.1} parent=11 // pred_check
          %p162 = pneg %p108
        $region18: #{tpu_custom_call.1} parent=11 // pred_check_branch
          %164 = sbr.rel (%p162) target = $region20
        $region19: #{tpu_custom_call.1} parent=11 // pred_region
          %s166 = ssub.s32 1152, 1152
          %167 = vsyncadd [#allocation5], %s166
          %s168 = sshll.u32 [#allocation6], 4
          %s169 = int_to_ptr.vmem [resolvable:$true] %s168
          %174 = dma.hbm_to_vmem [thread:$0]  %s3, 1152, %s169, [#allocation5], 128, 128, 8
        $region20: #{tpu_custom_call.1} parent=11 // pred_fallthru
          _
      $region12: #{tpu_custom_call.1} parent=5 // pred_fallthru
        _
      %p175 = scmp.lt.s32.totalorder %s14, 2
      // Predicated region
      $region21: #{tpu_custom_call.1} parent=5 // pred_check
        %p176 = pneg %p175
      $region22: #{tpu_custom_call.1} parent=5 // pred_check_branch
        %178 = sbr.rel (%p176) target = $region24
      $region23: #{tpu_custom_call.1} parent=5 // pred_region
        // Predicated region
        $region25: #{tpu_custom_call.1} parent=23 // pred_check
          %p179 = pneg %p34
        $region26: #{tpu_custom_call.1} parent=23 // pred_check_branch
          %181 = sbr.rel (%p179) target = $region28
        $region27: #{tpu_custom_call.1} parent=23 // pred_region
          %s182 = sand.u32 %s24, 1
          %s183 = scalar_lea.sflag [#allocation3], %s182
          %s184 = sand.u32 %s24, 1
          %s185 = smul.addr %s184, 64
          %s186 = scalar_lea.vmem [#allocation2], %s185
          %s188 = ssub.s32 1024, 1024
          %189 = vsyncadd %s183, %s188
          %s190 = smul.addr %s14, 8
          %s191 = smul.addr %s190, 128
          %s192 = scalar_lea.hbm %s0, %s191
          %s193 = sshll.u32 %s186, 4
          %s194 = int_to_ptr.vmem [resolvable:$true] %s193
          %199 = dma.hbm_to_vmem [thread:$0]  %s192, 1024, %s194, %s183, 128, 128, 8
        $region28: #{tpu_custom_call.1} parent=23 // pred_fallthru
          _
        // Predicated region
        $region29: #{tpu_custom_call.1} parent=23 // pred_check
          %p200 = pneg %p81
        $region30: #{tpu_custom_call.1} parent=23 // pred_check_branch
          %202 = sbr.rel (%p200) target = $region32
        $region31: #{tpu_custom_call.1} parent=23 // pred_region
          %p203 = scmp.lt.s32.totalorder %s14, 1
          %s204 = scalar_select %p203, %s14, 1
          %s205 = scalar_lea.vmem %s2, %s204
        $region32: #{tpu_custom_call.1} parent=23 // pred_fallthru
          _
      $region24: #{tpu_custom_call.1} parent=5 // pred_fallthru
        _
      %p206 = scmp.le.s32.totalorder 1, %s14
      %p207 = scmp.lt.s32.totalorder %s14, 3
      %p208 = pnand %p206, %p207
      %p209 = pneg %p208
      // Predicated region
      $region33: #{tpu_custom_call.1} parent=5 // pred_check
        _
      $region34: #{tpu_custom_call.1} parent=5 // pred_check_branch
        %211 = sbr.rel (%p208) target = $region36
      $region35: #{tpu_custom_call.1} parent=5 // pred_region
        %s212 = ssub.s32 %s14, 1
        %s213 = sand.u32 %s27, 1
        %s214 = scalar_lea.sflag [#allocation3], %s213
        %s215 = sand.u32 %s27, 1
        %s216 = smul.addr %s215, 64
        %s217 = scalar_lea.vmem [#allocation2], %s216
        // Predicated region
        $region37: #{tpu_custom_call.1} parent=35 // pred_check
          %p218 = pneg %p40
        $region38: #{tpu_custom_call.1} parent=35 // pred_check_branch
          %220 = sbr.rel (%p218) target = $region40
        $region39: #{tpu_custom_call.1} parent=35 // pred_region
          %221 = dma.done %s214, 1024
        $region40: #{tpu_custom_call.1} parent=35 // pred_fallthru
          _
        // Predicated region
        $region41: #{tpu_custom_call.1} parent=35 // pred_check
          %p222 = pneg %p61
        $region42: #{tpu_custom_call.1} parent=35 // pred_check_branch
          %224 = sbr.rel (%p222) target = $region44
        $region43: #{tpu_custom_call.1} parent=35 // pred_region
          %225 = dma.done [#allocation5], 1024
        $region44: #{tpu_custom_call.1} parent=35 // pred_fallthru
          _
        // Predicated region
        $region45: #{tpu_custom_call.1} parent=35 // pred_check
          %p226 = pneg %p108
        $region46: #{tpu_custom_call.1} parent=35 // pred_check_branch
          %228 = sbr.rel (%p226) target = $region48
        $region47: #{tpu_custom_call.1} parent=35 // pred_region
          %229 = dma.done [#allocation5], 1152
        $region48: #{tpu_custom_call.1} parent=35 // pred_fallthru
          _
        %s230 = sand.u32 %s27, 1
        %s231 = scalar_lea.sflag [#allocation3], %s230
        %s232 = sand.u32 %s27, 1
        %s233 = smul.addr %s232, 64
        %s234 = scalar_lea.vmem [#allocation2], %s233
        %p235 = pneg %p40
        %p236 = pneg %p37
        %p237 = pneg %p61
        %p238 = pneg %p58
        %p239 = scmp.lt.s32.totalorder %s19, 1
        %s240 = scalar_select %p239, %s19, 1
        %s241 = scalar_lea.vmem %s2, %s240
        %p242 = pneg %p87
        %p243 = pneg %p84
        %p244 = pneg %p108
        %p245 = pneg %p105
        %p246 = pneg %p134
        %p247 = pneg %p131
        %p248 = scmp.lt.s32.totalorder %s19, 1
        %s249 = scalar_select %p248, %s19, 1
        %s250 = smul.addr %s249, 9
        %s251 = smul.addr %s250, 8
        %s252 = scalar_lea.vmem %s4, %s251
        %p253 = scmp.lt.s32.totalorder %s19, 1
        %s254 = scalar_select %p253, %s19, 1
        %s255 = scalar_lea.vmem %s2, %s254
        %p256 = scmp.lt.s32.totalorder %s19, 1
        %s257 = scalar_select %p256, %s19, 1
        %s258 = smul.addr %s257, 9
        %s259 = smul.addr %s258, 8
        %s260 = scalar_lea.vmem %s4, %s259
        %v261 = vld [vmem:[%s217] sm:$0xff]
        %v262 = vld [vmem:[%s217 + $0x8] sm:$0xff]
        %v263 = vld [vmem:[%s217 + $0x10] sm:$0xff]
        %v264 = vld [vmem:[%s217 + $0x18] sm:$0xff]
        %v265 = vld [vmem:[%s217 + $0x20] sm:$0xff]
        %v266 = vld [vmem:[%s217 + $0x28] sm:$0xff]
        %v267 = vld [vmem:[%s217 + $0x30] sm:$0xff]
        %v268 = vld [vmem:[%s217 + $0x38] sm:$0xff]
        %v269 = vld [vmem:[#allocation4] sm:$0xff]
        %v270 = vld [vmem:[#allocation4 + $0x8] sm:$0xff]
        %v271 = vld [vmem:[#allocation4 + $0x10] sm:$0xff]
        %v272 = vld [vmem:[#allocation4 + $0x18] sm:$0xff]
        %v273 = vld [vmem:[#allocation4 + $0x20] sm:$0xff]
        %v274 = vld [vmem:[#allocation4 + $0x28] sm:$0xff]
        %v275 = vld [vmem:[#allocation4 + $0x30] sm:$0xff]
        %v276 = vld [vmem:[#allocation4 + $0x38] sm:$0xff]
        %277 = vxpose.xlu0.b32.start [1/16] %v261, 128
        %278 = vxpose.xlu0.b32.cont [2/16] %v262, 128
        %279 = vxpose.xlu0.b32.cont [3/16] %v263, 128
        %280 = vxpose.xlu0.b32.cont [4/16] %v264, 128
        %281 = vxpose.xlu0.b32.cont [5/16] %v265, 128
        %282 = vxpose.xlu0.b32.cont [6/16] %v266, 128
        %283 = vxpose.xlu0.b32.cont [7/16] %v267, 128
        %284 = vxpose.xlu0.b32.cont [8/16] %v268, 128
        %285 = vxpose.xlu0.b32.cont [9/16] 0.0, 128
        %286 = vxpose.xlu0.b32.cont [10/16] 0.0, 128
        %287 = vxpose.xlu0.b32.cont [11/16] 0.0, 128
        %288 = vxpose.xlu0.b32.cont [12/16] 0.0, 128
        %289 = vxpose.xlu0.b32.cont [13/16] 0.0, 128
        %290 = vxpose.xlu0.b32.cont [14/16] 0.0, 128
        %291 = vxpose.xlu0.b32.cont [15/16] 0.0, 128
        %292 = vxpose.xlu0.b32.end [16/16] 0.0, 128
        %v293 = vpop.trf.xlu0
        %v294 = vpop.trf.xlu0
        %v295 = vpop.trf.xlu0
        %v296 = vpop.trf.xlu0
        %v297 = vpop.trf.xlu0
        %v298 = vpop.trf.xlu0
        %v299 = vpop.trf.xlu0
        %v300 = vpop.trf.xlu0
        %v301 = vpop.trf.xlu0
        %v302 = vpop.trf.xlu0
        %v303 = vpop.trf.xlu0
        %v304 = vpop.trf.xlu0
        %v305 = vpop.trf.xlu0
        %v306 = vpop.trf.xlu0
        %v307 = vpop.trf.xlu0
        %v308 = vpop.trf.xlu0
        %vm309 = vcmask 523264
        %v311 = vsel %vm309, %v293, 0
        %v314 = vsel %vm309, %v294, 0
        %v317 = vsel %vm309, %v295, 0
        %v320 = vsel %vm309, %v296, 0
        %v323 = vsel %vm309, %v297, 0
        %v326 = vsel %vm309, %v298, 0
        %v329 = vsel %vm309, %v299, 0
        %v332 = vsel %vm309, %v300, 0
        %334 = vmatprep.subr.mxu0 0.0
        %335 = vmatpush1.msra.mxu0 0.0
        %336 = vmatprep.subr.mxu0 0.0
        %337 = vmatpush1.msra.mxu0 0.0
        %338 = vmatprep.subr.mxu0 0.0
        %339 = vmatpush1.msra.mxu0 0.0
        %340 = vmatprep.subr.mxu0 0.0
        %341 = vmatpush1.msra.mxu0 0.0
        %342 = vmatprep.subr.mxu0 0.0
        %343 = vmatpush1.msra.mxu0 0.0
        %344 = vmatprep.subr.mxu0 0.0
        %345 = vmatpush1.msra.mxu0 0.0
        %346 = vmatprep.subr.mxu0 0.0
        %347 = vmatpush1.msra.mxu0 0.0
        %348 = vmatprep.subr.mxu0 0.0
        %349 = vmatpush1.msra.mxu0 0.0
        %350 = vmatprep.subr.mxu0 0.0
        %351 = vmatpush1.msra.mxu0 %v276
        %352 = vmatprep.subr.mxu0 0.0
        %353 = vmatpush1.msra.mxu0 %v275
        %354 = vmatprep.subr.mxu0 0.0
        %355 = vmatpush1.msra.mxu0 %v274
        %356 = vmatprep.subr.mxu0 0.0
        %357 = vmatpush1.msra.mxu0 %v273
        %358 = vmatprep.subr.mxu0 0.0
        %359 = vmatpush1.msra.mxu0 %v272
        %360 = vmatprep.subr.mxu0 0.0
        %361 = vmatpush1.msra.mxu0 %v271
        %362 = vmatprep.subr.mxu0 0.0
        %363 = vmatpush1.msra.mxu0 %v270
        %364 = vmatprep.subr.mxu0 0.0
        %365 = vmatpush1.msra.mxu0 %v269
        %366 = vmatprep.subr.mxu0 0.0
        %367 = vmatpush2.msra.mxu0 0.0
        %368 = vmatprep.subr.mxu0 0.0
        %369 = vmatpush2.msra.mxu0 0.0
        %370 = vmatprep.subr.mxu0 0.0
        %371 = vmatpush2.msra.mxu0 0.0
        %372 = vmatprep.subr.mxu0 0.0
        %373 = vmatpush2.msra.mxu0 0.0
        %374 = vmatprep.subr.mxu0 0.0
        %375 = vmatpush2.msra.mxu0 0.0
        %376 = vmatprep.subr.mxu0 0.0
        %377 = vmatpush2.msra.mxu0 0.0
        %378 = vmatprep.subr.mxu0 0.0
        %379 = vmatpush2.msra.mxu0 0.0
        %380 = vmatprep.subr.mxu0 0.0
        %381 = vmatpush2.msra.mxu0 0.0
        %382 = vmatprep.subr.mxu0 0.0
        %383 = vmatpush2.msra.mxu0 0.0
        %384 = vmatprep.subr.mxu0 0.0
        %385 = vmatpush2.msra.mxu0 0.0
        %386 = vmatprep.subr.mxu0 0.0
        %387 = vmatpush2.msra.mxu0 0.0
        %388 = vmatprep.subr.mxu0 0.0
        %389 = vmatpush2.msra.mxu0 0.0
        %390 = vmatprep.subr.mxu0 0.0
        %391 = vmatpush2.msra.mxu0 0.0
        %392 = vmatprep.subr.mxu0 0.0
        %393 = vmatpush2.msra.mxu0 0.0
        %394 = vmatprep.subr.mxu0 0.0
        %395 = vmatpush2.msra.mxu0 0.0
        %396 = vmatprep.subr.mxu0 0.0
        %397 = vmatpush2.msra.mxu0 0.0
        %398 = vmatprep.mubr.f32.mxu0 0.0
        %399 = vmatmul.mubr.f32.gmra.mxu0 %v311
        %v400 = vpop.f32.mrf.mxu0
        %v401 = vadd.f32 0.0, %v400
        %v402 = vpop.f32.mrf.mxu0
        %403 = vmatprep.mubr.f32.mxu0 0.0
        %404 = vmatmul.mubr.f32.gmra.mxu0 %v314
        %v405 = vpop.f32.mrf.mxu0
        %v406 = vadd.f32 0.0, %v405
        %v407 = vpop.f32.mrf.mxu0
        %408 = vmatprep.mubr.f32.mxu0 0.0
        %409 = vmatmul.mubr.f32.gmra.mxu0 %v317
        %v410 = vpop.f32.mrf.mxu0
        %v411 = vadd.f32 0.0, %v410
        %v412 = vpop.f32.mrf.mxu0
        %413 = vmatprep.mubr.f32.mxu0 0.0
        %414 = vmatmul.mubr.f32.gmra.mxu0 %v320
        %v415 = vpop.f32.mrf.mxu0
        %v416 = vadd.f32 0.0, %v415
        %v417 = vpop.f32.mrf.mxu0
        %418 = vmatprep.mubr.f32.mxu0 0.0
        %419 = vmatmul.mubr.f32.gmra.mxu0 %v323
        %v420 = vpop.f32.mrf.mxu0
        %v421 = vadd.f32 0.0, %v420
        %v422 = vpop.f32.mrf.mxu0
        %423 = vmatprep.mubr.f32.mxu0 0.0
        %424 = vmatmul.mubr.f32.gmra.mxu0 %v326
        %v425 = vpop.f32.mrf.mxu0
        %v426 = vadd.f32 0.0, %v425
        %v427 = vpop.f32.mrf.mxu0
        %428 = vmatprep.mubr.f32.mxu0 0.0
        %429 = vmatmul.mubr.f32.gmra.mxu0 %v329
        %v430 = vpop.f32.mrf.mxu0
        %v431 = vadd.f32 0.0, %v430
        %v432 = vpop.f32.mrf.mxu0
        %433 = vmatprep.mubr.f32.mxu0 0.0
        %434 = vmatmul.mubr.f32.gmra.mxu0 %v332
        %v435 = vpop.f32.mrf.mxu0
        %v436 = vadd.f32 0.0, %v435
        %v437 = vpop.f32.mrf.mxu0
        %438 = vdwg.mxu0
        %v439 = vld [vmem:[%s255] sm:$0x1]
        %v440 = vld [vmem:[#allocation6] sm:$0xff]
        %v441 = vld [vmem:[#allocation6 + $0x8] sm:$0xff]
        %v442 = vld [vmem:[#allocation6 + $0x10] sm:$0xff]
        %v443 = vld [vmem:[#allocation6 + $0x18] sm:$0xff]
        %v444 = vld [vmem:[#allocation6 + $0x20] sm:$0xff]
        %v445 = vld [vmem:[#allocation6 + $0x28] sm:$0xff]
        %v446 = vld [vmem:[#allocation6 + $0x30] sm:$0xff]
        %v447 = vld [vmem:[#allocation6 + $0x38] sm:$0xff]
        %v448 = vld [vmem:[#allocation6 + $0x40] sm:$0x1]
        %v449 = vadd.f32 %v401, %v440
        %v450 = vadd.f32 %v406, %v441
        %v451 = vadd.f32 %v411, %v442
        %v452 = vadd.f32 %v416, %v443
        %v453 = vadd.f32 %v421, %v444
        %v454 = vadd.f32 %v426, %v445
        %v455 = vadd.f32 %v431, %v446
        %v456 = vadd.f32 %v436, %v447
        %v457 = vadd.f32 %v439, %v448
        %458 = vst [vmem:[%s260] sm:$0xff] %v449
        %459 = vst [vmem:[%s260 + $0x8] sm:$0xff] %v450
        %460 = vst [vmem:[%s260 + $0x10] sm:$0xff] %v451
        %461 = vst [vmem:[%s260 + $0x18] sm:$0xff] %v452
        %462 = vst [vmem:[%s260 + $0x20] sm:$0xff] %v453
        %463 = vst [vmem:[%s260 + $0x28] sm:$0xff] %v454
        %464 = vst [vmem:[%s260 + $0x30] sm:$0xff] %v455
        %465 = vst [vmem:[%s260 + $0x38] sm:$0xff] %v456
        %466 = vst [vmem:[%s260 + $0x40] sm:$0x1] %v457
        %p467 = scmp.lt.s32.totalorder %s19, 1
        %s468 = scalar_select %p467, %s19, 1
        %s469 = smul.addr %s468, 9
        %s470 = smul.addr %s469, 8
        %s471 = scalar_lea.vmem %s4, %s470
        // Predicated region
        $region49: #{tpu_custom_call.1} parent=35 // pred_check
          %p472 = pneg %p131
        $region50: #{tpu_custom_call.1} parent=35 // pred_check_branch
          %474 = sbr.rel (%p472) target = $region52
        $region51: #{tpu_custom_call.1} parent=35 // pred_region
          _
        $region52: #{tpu_custom_call.1} parent=35 // pred_fallthru
          _
      $region36: #{tpu_custom_call.1} parent=5 // pred_fallthru
        _
      %p475 = scmp.le.s32.totalorder 2, %s14
      // Predicated region
      $region53: #{tpu_custom_call.1} parent=5 // pred_check
        %p476 = pneg %p475
      $region54: #{tpu_custom_call.1} parent=5 // pred_check_branch
        %478 = sbr.rel (%p476) target = $region56
      $region55: #{tpu_custom_call.1} parent=5 // pred_region
        %s479 = ssub.s32 %s14, 2
        // Predicated region
        $region57: #{tpu_custom_call.1} parent=55 // pred_check
          %p480 = pneg %p137
        $region58: #{tpu_custom_call.1} parent=55 // pred_check_branch
          %482 = sbr.rel (%p480) target = $region60
        $region59: #{tpu_custom_call.1} parent=55 // pred_region
          %p483 = scmp.lt.s32.totalorder %s20, 1
          %s484 = scalar_select %p483, %s20, 1
          %s485 = smul.addr %s484, 9
          %s486 = smul.addr %s485, 8
          %s487 = scalar_lea.vmem %s4, %s486
        $region60: #{tpu_custom_call.1} parent=55 // pred_fallthru
          _
      $region56: #{tpu_custom_call.1} parent=5 // pred_fallthru
        _
    $region6: #{tpu_custom_call.1} parent=1 // loop_footer
      %s18 = sadd.s32 1, %s14
    $region7: #{tpu_custom_call.1} parent=1 // loop_footer_branch
      %13 = sbr.rel target = $region3
    $region8: #{tpu_custom_call.1} parent=1 // loop_exit
      _
    %488 = vsyncpa [#allocation3], 1
    %s489 = scalar_lea.sflag [#allocation3], 1
    %490 = vsyncpa %s489, 1
    %491 = vsyncpa [#allocation5], 1

</llo_original>
